<compile_context>
chip_gen: v5e
topology: v5e:2x2
jax: 0.10.0
libtpu: 0.0.40
codegen_flags: <defaults>
</compile_context>

<pallas_src>
import functools
import math

import jax
import jax.numpy as jnp
import numpy as np
from jax.experimental import pallas as pl
from jax.experimental.pallas import tpu as pltpu


# ---------------------------------------------------------------------------
# helpers
# ---------------------------------------------------------------------------

def _round_up(x, m):
    return ((x + m - 1) // m) * m


def _cdiv(a, b):
    return (a + b - 1) // b


def _largest_dividing_tile(total, cap, quantum=128):
    """Largest multiple of `quantum` <= cap that divides `total` (total % quantum == 0)."""
    t = max(quantum, (min(cap, total) // quantum) * quantum)
    while total % t:
        t -= quantum
    return t


def _apply_act(y, act):
    if act is None:
        return y
    if act == "relu":
        return jnp.maximum(y, 0.0)
    if act == "silu":
        return y * jax.nn.sigmoid(y)
    if act == "gelu":
        return jax.nn.gelu(y)
    raise ValueError(f"unsupported activation: {act!r}")


# ---------------------------------------------------------------------------
# Kernel 1: fused matmul + folded-BN bias + activation
# (1x1 convs and the im2col fallback for strided convs)
# ---------------------------------------------------------------------------

def _matmul_bias_act_kernel(x_ref, w_ref, b_ref, o_ref, *, act):
    # x_ref: (TM, Kd)   bf16   flattened output positions x reduction dim
    # w_ref: (Kd, TN)   bf16   BN-folded conv weights
    # b_ref: (1, TN)    f32    BN-folded bias
    # o_ref: (TM, TN)          output tile
    acc = jnp.dot(x_ref[...], w_ref[...], preferred_element_type=jnp.float32)
    o_ref[...] = _apply_act(acc + b_ref[...], act).astype(o_ref.dtype)


def _fused_matmul_bias_act(x2d, w2d, bias, *, act, out_dtype):
    """y = act(x2d @ w2d + bias).  x2d: (M, Kd) bf16, w2d: (Kd, Cout) f32."""
    M, kd = x2d.shape
    cout = w2d.shape[1]
    out_itemsize = jnp.dtype(out_dtype).itemsize

    # Reduction-dim padding: always to a sublane multiple (8); additionally to a
    # lane multiple (128) only when the zero-fill adds <= 1/8 extra HBM traffic
    # (for tiny Kd the physically padded copy would cost more than lane-dense
    # loads buy on these mem-bound layers).
    kd_p = _round_up(kd, 8)
    kd128 = _round_up(kd, 128)
    if kd128 - kd <= max(kd // 8, 0):
        kd_p = kd128

    cout_p = _round_up(cout, 128)                      # lane-dense output channels

    # --- tile selection (VMEM-budget aware, >= 2 row programs for v7x) --------
    tm = min(512, _round_up(M, 8))
    if M > 8 and _cdiv(M, tm) < 2:                     # keep both v7x TCs busy
        tm = max(8, _round_up(_cdiv(M, 2), 8))
    tn = _largest_dividing_tile(cout_p, 512)

    def _footprint(tm_, tn_):                          # double-buffered bytes
        return 2 * (tm_ * kd_p * 2 + kd_p * tn_ * 2 + tn_ * 4
                    + tm_ * tn_ * out_itemsize)

    budget = 40 * 1024 * 1024                          # headroom on v7x's 64 MiB core
    while _footprint(tm, tn) > budget:
        if tm > 64 and (tm >= tn or tn <= 128):
            tm = _round_up(max(64, tm // 2), 8)
        elif tn > 128:
            new_tn = _largest_dividing_tile(cout_p, max(128, tn // 2))
            if new_tn == tn:
                break
            tn = new_tn
        else:
            break
    # TODO(synk): add a K-reduction grid axis (+ f32 accumulator scratch) instead
    # of shrinking tm when Kd is very large.

    m_p = _round_up(M, tm)

    x_p = x2d.astype(jnp.bfloat16)
    if (m_p, kd_p) != (M, kd):
        x_p = jnp.pad(x_p, ((0, m_p - M), (0, kd_p - kd)))
    w_p = w2d.astype(jnp.bfloat16)
    if (kd_p, cout_p) != (kd, cout):
        w_p = jnp.pad(w_p, ((0, kd_p - kd), (0, cout_p - cout)))
    b_p = bias.reshape(1, cout).astype(jnp.float32)
    if cout_p != cout:
        b_p = jnp.pad(b_p, ((0, 0), (0, cout_p - cout)))

    vmem_limit = int(min(48 * 1024 * 1024,
                         max(24 * 1024 * 1024,
                             int(1.5 * _footprint(tm, tn)) + (2 << 20))))

    out = pl.pallas_call(
        functools.partial(_matmul_bias_act_kernel, act=act),
        out_shape=jax.ShapeDtypeStruct((m_p, cout_p), out_dtype),
        grid=(m_p // tm, cout_p // tn),
        in_specs=[
            pl.BlockSpec((tm, kd_p), lambda i, j: (i, 0)),     # activation rows
            pl.BlockSpec((kd_p, tn), lambda i, j: (0, j)),     # folded weights
            pl.BlockSpec((1, tn), lambda i, j: (0, j)),        # folded bias
        ],
        out_specs=pl.BlockSpec((tm, tn), lambda i, j: (i, j)),
        compiler_params=pltpu.CompilerParams(
            dimension_semantics=("parallel", "parallel"),
            vmem_limit_bytes=vmem_limit,
        ),
    )(x_p, w_p, b_p)

    return out[:M, :cout]


# ---------------------------------------------------------------------------
# Kernel 2: in-kernel halo-tiled KxK / stride-1 conv + folded-BN bias + act
# ---------------------------------------------------------------------------

def _halo_conv_kernel(x_ref, w_ref, b_ref, o_ref, *, K, tr, w_out_p, act):
    # x_ref: (H_pad_p, W_pad_p, Cin)   bf16  full padded image (one batch elem)
    # w_ref: (K, K, Cin, Cout_p)       bf16  BN-folded conv weights
    # b_ref: (1, Cout_p)               f32   BN-folded bias
    # o_ref: (tr, W_out_p, Cout_p)           output row-tile
    cin = x_ref.shape[-1]
    cout_p = o_ref.shape[-1]
    row0 = pl.program_id(1) * tr

    acc = jnp.zeros((tr * w_out_p, cout_p), jnp.float32)
    for ky in range(K):                                    # K*K shifted-window dots
        for kx in range(K):
            win = x_ref[pl.ds(row0 + ky, tr), pl.ds(kx, w_out_p), :]
            win = win.reshape(tr * w_out_p, cin)
            acc = acc + jnp.dot(win, w_ref[ky, kx],
                                preferred_element_type=jnp.float32)

    y = _apply_act(acc + b_ref[...], act)
    o_ref[...] = y.reshape(tr, w_out_p, cout_p).astype(o_ref.dtype)


def _fused_conv_halo(x_nhwc_bf16, w_hwio, bias, *, K, pad, act, out_dtype):
    """act(conv_stride1(x) + bias), NHWC in / NHWC out.  Returns None if the
    padded image + weights would not fit the per-step VMEM budget."""
    n, h, w, cin = x_nhwc_bf16.shape
    cout = w_hwio.shape[-1]
    cout_p = _round_up(cout, 128)
    h_out = h + 2 * pad - K + 1
    w_out = w + 2 * pad - K + 1
    w_out_p = _round_up(w_out, 8)                       # sublane-aligned reshapes

    # Output row tile: ~512 matmul rows per step; >= 2 row tiles so both v7x
    # TensorCores have work even at batch 1.
    tr = max(1, min(h_out, 512 // max(w_out_p, 1)))
    if h_out >= 2:
        tr = min(tr, _cdiv(h_out, 2))
    h_out_p = _round_up(h_out, tr)
    n_row_tiles = h_out_p // tr

    h_pad_p = h_out_p + K - 1
    w_pad_p = w_out_p + K - 1

    out_itemsize = jnp.dtype(out_dtype).itemsize
    img_bytes = h_pad_p * w_pad_p * cin * 2
    wgt_bytes = K * K * cin * cout_p * 2
    out_bytes = tr * w_out_p * cout_p * out_itemsize
    acc_bytes = tr * w_out_p * cout_p * 4
    footprint = 2 * (img_bytes + wgt_bytes + out_bytes) + acc_bytes + cout_p * 8
    if footprint > 40 * 1024 * 1024:                    # too big: caller falls back
        return None
    vmem_limit = int(min(48 * 1024 * 1024,
                         max(24 * 1024 * 1024, int(1.5 * footprint) + (2 << 20))))

    # Spatial zero-pad (bf16): conv padding + bottom/right padding up to the
    # tile-aligned extents (extra rows/cols are sliced off below).
    xp = jnp.pad(x_nhwc_bf16,
                 ((0, 0), (pad, h_pad_p - h - pad), (pad, w_pad_p - w - pad),
                  (0, 0)))
    w_p = w_hwio.astype(jnp.bfloat16)
    if cout_p != cout:
        w_p = jnp.pad(w_p, ((0, 0), (0, 0), (0, 0), (0, cout_p - cout)))
    b_p = bias.reshape(1, cout).astype(jnp.float32)
    if cout_p != cout:
        b_p = jnp.pad(b_p, ((0, 0), (0, cout_p - cout)))

    kern = functools.partial(_halo_conv_kernel, K=K, tr=tr, w_out_p=w_out_p,
                             act=act)
    out = pl.pallas_call(
        kern,
        out_shape=jax.ShapeDtypeStruct((n, h_out_p, w_out_p, cout_p), out_dtype),
        grid=(n, n_row_tiles),
        in_specs=[
            # Whole padded image: constant across the row-tile axis, so it is
            # DMA'd once per batch element and prefetched across the batch axis.
            pl.BlockSpec((None, h_pad_p, w_pad_p, cin), lambda b, r: (b, 0, 0, 0)),
            pl.BlockSpec((K, K, cin, cout_p), lambda b, r: (0, 0, 0, 0)),
            pl.BlockSpec((1, cout_p), lambda b, r: (0, 0)),
        ],
        out_specs=pl.BlockSpec((None, tr, w_out_p, cout_p),
                               lambda b, r: (b, r, 0, 0)),
        compiler_params=pltpu.CompilerParams(
            dimension_semantics=("parallel", "arbitrary"),
            vmem_limit_bytes=vmem_limit,
        ),
    )(xp, w_p, b_p)

    return out[:, :h_out, :w_out, :cout]


# ---------------------------------------------------------------------------
# ConvNormLayer forward (Pallas)
# ---------------------------------------------------------------------------

def conv_norm_layer(x_nchw, params, *, stride=1, padding=None, act=None,
                    eps=1e-5, out_dtype=None):
    """act(BatchNorm2d(Conv2d(x))).  x_nchw: (N, Cin, H, W)."""
    w_oihw = params["weight"]                   # (Cout, Cin, K, K)
    cout, cin, kh, kw = w_oihw.shape
    assert kh == kw, "square kernels only"
    K = kh
    pad = (K - 1) // 2 if padding is None else padding
    out_dtype = x_nchw.dtype if out_dtype is None else out_dtype

    # --- fold eval-mode BN (and optional conv bias) into weight/bias ----------
    scale = params["gamma"] / jnp.sqrt(params["var"] + eps)          # (Cout,)
    bias = params["beta"] - params["mean"] * scale
    if params.get("bias") is not None:
        bias = bias + params["bias"] * scale
    w_hwio = jnp.transpose(w_oihw, (2, 3, 1, 0)) * scale[None, None, None, :]

    # --- NCHW -> NHWC, bf16 once (all staging copies are bf16) ----------------
    x = jnp.transpose(x_nchw, (0, 2, 3, 1)).astype(jnp.bfloat16)
    n, h, w, _ = x.shape
    h_out = (h + 2 * pad - K) // stride + 1
    w_out = (w + 2 * pad - K) // stride + 1

    y = None
    if K == 1 and stride == 1 and pad == 0:
        # pointwise conv == pure channel matmul over flattened rows
        y2d = _fused_matmul_bias_act(x.reshape(n * h * w, cin),
                                     w_hwio.reshape(cin, cout), bias,
                                     act=act, out_dtype=out_dtype)
        y = y2d.reshape(n, h, w, cout)
    elif stride == 1:
        # in-kernel halo-tiled conv: no K^2 HBM duplication of the activations
        y = _fused_conv_halo(x, w_hwio, bias, K=K, pad=pad, act=act,
                             out_dtype=out_dtype)

    if y is None:
        # Strided conv (or halo footprint exceeded VMEM budget): bf16 im2col in
        # the wrapper, then the tiled fused matmul kernel.
        xp = jnp.pad(x, ((0, 0), (pad, pad), (pad, pad), (0, 0)))
        cols = []
        for ky in range(K):
            for kx in range(K):
                cols.append(xp[:, ky:ky + (h_out - 1) * stride + 1:stride,
                               kx:kx + (w_out - 1) * stride + 1:stride, :])
        x2d = jnp.concatenate(cols, axis=-1).reshape(n * h_out * w_out,
                                                     K * K * cin)
        y2d = _fused_matmul_bias_act(x2d, w_hwio.reshape(K * K * cin, cout),
                                     bias, act=act, out_dtype=out_dtype)
        y = y2d.reshape(n, h_out, w_out, cout)

    return jnp.transpose(y, (0, 3, 1, 2))       # back to NCHW


# ---------------------------------------------------------------------------
# deterministic parameter construction + pure-JAX reference
# ---------------------------------------------------------------------------

def make_params(key, ch_in, ch_out, kernel_size, use_bias=False):
    kw, kb, kg, kbe, km, kv = jax.random.split(key, 6)
    fan_in = ch_in * kernel_size * kernel_size
    return {
        "weight": jax.random.normal(
            kw, (ch_out, ch_in, kernel_size, kernel_size), jnp.float32)
        / math.sqrt(fan_in),
        "gamma": 1.0 + 0.1 * jax.random.normal(kg, (ch_out,), jnp.float32),
        "beta": 0.1 * jax.random.normal(kbe, (ch_out,), jnp.float32),
        "mean": 0.1 * jax.random.normal(km, (ch_out,), jnp.float32),
        "var": jax.random.uniform(kv, (ch_out,), jnp.float32,
                                  minval=0.5, maxval=1.5),
        "bias": (0.1 * jax.random.normal(kb, (ch_out,), jnp.float32)
                 if use_bias else None),
    }


def ref_conv_norm_layer(x_nchw, params, *, stride=1, padding=None, act=None,
                        eps=1e-5):
    w = params["weight"]
    K = w.shape[2]
    pad = (K - 1) // 2 if padding is None else padding
    y = jax.lax.conv_general_dilated(
        x_nchw.astype(jnp.float32), w,
        window_strides=(stride, stride),
        padding=((pad, pad), (pad, pad)),
        dimension_numbers=("NCHW", "OIHW", "NCHW"))
    if params.get("bias") is not None:
        y = y + params["bias"][None, :, None, None]
    scale = (params["gamma"] / jnp.sqrt(params["var"] + eps))[None, :, None, None]
    y = (y - params["mean"][None, :, None, None]) * scale \
        + params["beta"][None, :, None, None]
    return _apply_act(y, act)


# ---------------------------------------------------------------------------

if __name__ == "__main__":
    key = jax.random.PRNGKey(0)

    cases = [
        # (name, N, Cin, Cout, K, stride, H, W, act)
        ("1x1_s1_silu", 2, 32, 128, 1, 1, 16, 16, "silu"),   # pointwise matmul path
        ("3x3_s2_relu", 2, 16, 32, 3, 2, 16, 16, "relu"),    # strided im2col path
        ("3x3_s1_none", 2, 8, 64, 3, 1, 16, 16, None),       # halo-tiled conv path
    ]

    for i, (name, N, cin, cout, K, stride, H, W, act) in enumerate(cases):
        k_x, k_p = jax.random.split(jax.random.fold_in(key, i))
        x = jax.random.normal(k_x, (N, cin, H, W), jnp.float32)   # NCHW like PyTorch
        params = make_params(k_p, cin, cout, K)

        out = jax.block_until_ready(
            conv_norm_layer(x, params, stride=stride, act=act))
        ref = jax.block_until_ready(
            ref_conv_norm_layer(x, params, stride=stride, act=act))

        pad = (K - 1) // 2
        h_out = (H + 2 * pad - K) // stride + 1
        w_out = (W + 2 * pad - K) // stride + 1
        assert out.shape == (N, cout, h_out, w_out), (name, out.shape)
        # bf16 MXU inputs with f32 accumulation -> tolerance for bf16 rounding.
        np.testing.assert_allclose(np.asarray(out), np.asarray(ref),
                                   rtol=5e-2, atol=5e-2, err_msg=name)

    print("KERNEL_OK")
</pallas_src>

<mosaic_0001>
module attributes {stable_mosaic.version = 11 : i64} {
  func.func @_matmul_bias_act_kernel(%arg0: i32, %arg1: i32, %arg2: memref<256x32xbf16, #tpu.memory_space<vmem>>, %arg3: memref<32x128xbf16, #tpu.memory_space<vmem>>, %arg4: memref<1x128xf32, #tpu.memory_space<vmem>>, %arg5: memref<256x128xf32, #tpu.memory_space<vmem>>) attributes {dimension_semantics = [#tpu.dimension_semantics<parallel>, #tpu.dimension_semantics<parallel>], iteration_bounds = array<i64: 2, 1>, scalar_prefetch = 0 : i64, scratch_operands = 0 : i64, tpu.core_type = #tpu.core_type<tc>, window_params = [{transform_indices = @transform_0, window_bounds = array<i64: 256, 32>}, {transform_indices = @transform_1, window_bounds = array<i64: 32, 128>}, {transform_indices = @transform_2, window_bounds = array<i64: 1, 128>}, {transform_indices = @transform_3, window_bounds = array<i64: 256, 128>}]} {
    %c0 = arith.constant 0 : index
    %c0_0 = arith.constant 0 : index
    %0 = vector.load %arg2[%c0, %c0_0] : memref<256x32xbf16, #tpu.memory_space<vmem>>, vector<256x32xbf16>
    %c0_1 = arith.constant 0 : index
    %c0_2 = arith.constant 0 : index
    %1 = vector.load %arg3[%c0_1, %c0_2] : memref<32x128xbf16, #tpu.memory_space<vmem>>, vector<32x128xbf16>
    %cst = arith.constant dense<0.000000e+00> : vector<256x128xf32>
    %2 = tpu.matmul %0, %1, %cst {dimension_numbers = #tpu.dot_dimension_numbers<[1], [0], [0], [1], [0, 0, 1, 1], [], []>} : vector<256x32xbf16>, vector<32x128xbf16>, vector<256x128xf32> -> vector<256x128xf32>
    %c0_3 = arith.constant 0 : index
    %c0_4 = arith.constant 0 : index
    %3 = vector.load %arg4[%c0_3, %c0_4] : memref<1x128xf32, #tpu.memory_space<vmem>>, vector<1x128xf32>
    %4 = vector.broadcast %3 : vector<1x128xf32> to vector<256x128xf32>
    %5 = arith.addf %2, %4 : vector<256x128xf32>
    %6 = arith.negf %5 : vector<256x128xf32>
    %7 = math.exp %6 : vector<256x128xf32>
    %cst_5 = arith.constant 1.000000e+00 : f32
    %8 = vector.broadcast %cst_5 : f32 to vector<256x128xf32>
    %9 = arith.addf %8, %7 : vector<256x128xf32>
    %10 = arith.divf %8, %9 : vector<256x128xf32>
    %11 = arith.mulf %5, %10 : vector<256x128xf32>
    %c0_6 = arith.constant 0 : index
    %c0_7 = arith.constant 0 : index
    %12 = vector.load %arg5[%c0_6, %c0_7] : memref<256x128xf32, #tpu.memory_space<vmem>>, vector<256x128xf32>
    tpu.vector_store %arg5[%c0_6, %c0_7], %11 {strides = array<i32>} : memref<256x128xf32, #tpu.memory_space<vmem>>, vector<256x128xf32>,
    return
  }
  func.func @transform_0(%arg0: i32, %arg1: i32) -> (i32, i32) {
    %c0_i32 = arith.constant 0 : i32
    %c0_i32_0 = arith.constant 0 : i32
    return %arg0, %c0_i32 : i32, i32
  }
  func.func @transform_1(%arg0: i32, %arg1: i32) -> (i32, i32) {
    %c0_i32 = arith.constant 0 : i32
    %c0_i32_0 = arith.constant 0 : i32
    return %c0_i32, %arg1 : i32, i32
  }
  func.func @transform_2(%arg0: i32, %arg1: i32) -> (i32, i32) {
    %c0_i32 = arith.constant 0 : i32
    %c0_i32_0 = arith.constant 0 : i32
    return %c0_i32, %arg1 : i32, i32
  }
  func.func @transform_3(%arg0: i32, %arg1: i32) -> (i32, i32) {
    %c0_i32 = arith.constant 0 : i32
    return %arg0, %arg1 : i32, i32
  }
}

</mosaic_0001>

<llo_original>
// kernel: tpu_custom_call.1
$region0: #{tpu_custom_call.1}
  #allocation0 [shape = 'u32[]', space=smem, size = 0x4, offset = 0x4, fixed_abs, tag = 'smem constant byte address 0x4 - core index']
  #allocation1 [shape = 'u32[72,128]{1,0:T(1,128)}', space=vmem, size = 0x9000, scoped, tag = 'internal scratch']
  %s0 = inlined_call_operand.vmem [shape: bf16[512,32], index: 0, kind: input, shape index: {}]
  %s1 = inlined_call_operand.vmem [shape: bf16[32,128], index: 1, kind: input, shape index: {}]
  %s2 = inlined_call_operand.vmem [shape: f32[1,128], index: 2, kind: input, shape index: {}]
  %s3 = inlined_call_operand.hbm [shape: f32[512,128], index: 3, kind: output, shape index: {}]
  %s4 = sld [smem:[#allocation0]]
  $region45: #{tpu_custom_call.1} parent=0
    _
  %s6 = ssub.s32 1, %s4
  %s7 = scalar_select 0, %s6, %s4
  $region1: #{tpu_custom_call.1} parent=0
    #allocation2 [shape = 'u8[262144]{0}', space=vmem, size = 0x40000, scoped, tag = 'output window, operand 0']
    #allocation3 [shape = 's32[2]{0}', space=sflag, size = 0x8, scoped, tag = 'scoped memory for tpu_custom_call.1']
    %8 = vsyncpa [#allocation3], 0
    %s9 = scalar_lea.sflag [#allocation3], 1
    %10 = vsyncpa %s9, 0
    loop: start=0, step=1, limit=4
    $region2: #{tpu_custom_call.1} parent=1 // loop_pre_header
      _
    $region3: #{tpu_custom_call.1} parent=1 // loop_header
      %s12 = sphi 0, %s16
      %p13 = scmp.ge.s32.totalorder %s12, 4
      %s19 = sphi 0, %s31
      %s20 = sphi 0, %s27
      %s21 = sphi 0, %s19
      %s22 = sphi 0, %s20
      %s23 = sphi 0, %s21
      %s24 = sphi 0, %s22
      %s34 = sphi 0, %s36
      %s37 = sphi 0, %s34
      %s38 = sphi 0, %s37
      %s54 = sphi 0, %s38
      %s60 = sphi 0, %s62
      %s63 = sphi 0, %s60
      %s64 = sphi 0, %s63
      %s80 = sphi 0, %s64
      %s86 = sphi 0, %s88
      %s89 = sphi 0, %s86
      %s90 = sphi 0, %s89
      %s106 = sphi 0, %s90
      %s114 = sphi 0, %s116
      %s117 = sphi 0, %s114
      %s118 = sphi 0, %s117
      %s134 = sphi 0, %s118
    $region4: #{tpu_custom_call.1} parent=1 // loop_header_branch
      %15 = sbr.rel (%p13) target = $region8
    $region5: #{tpu_custom_call.1} parent=1 // loop_body
      %s17 = ssub.s32 %s12, 1
      %s18 = ssub.s32 %s12, 2
      %s25 = sadd.s32 1, %s20
      %p26 = scmp.ge.s32.totalorder %s25, 1
      %s27 = scalar_select %p26, 0, %s25
      %s28 = sadd.s32 1, %s19
      %s29 = scalar_select %p26, %s28, %s19
      %p30 = scmp.ge.s32.totalorder %s29, 2
      %s31 = scalar_select %p30, 0, %s29
      %s32 = ssub.s32 %s19, %s31
      %p33 = scmp.eq.s32.totalorder %s32, 0
      %s35 = sadd.s32 %s34, 1
      %s36 = scalar_select %p33, %s34, %s35
      %p39 = pneg %p33
      %p40 = scmp.eq.s32.totalorder %s12, 1
      %p41 = por %p39, %p40
      %p42 = scmp.ne.s32.totalorder %s34, %s37
      %p43 = scmp.eq.s32.totalorder %s12, 0
      %p44 = por %p42, %p43
      %p45 = scmp.ne.s32.totalorder %s34, %s37
      %p46 = scmp.eq.s32.totalorder %s17, 1
      %p47 = por %p45, %p46
      %p48 = scmp.ne.s32.totalorder %s37, %s38
      %p49 = scmp.eq.s32.totalorder %s17, 0
      %p50 = por %p48, %p49
      %p51 = scmp.ne.s32.totalorder %s37, %s38
      %p52 = scmp.eq.s32.totalorder %s18, 1
      %p53 = por %p51, %p52
      %p55 = scmp.ne.s32.totalorder %s38, %s54
      %p56 = scmp.eq.s32.totalorder %s18, 0
      %p57 = por %p55, %p56
      %s58 = ssub.s32 %s20, %s27
      %p59 = scmp.eq.s32.totalorder %s58, 0
      %s61 = sadd.s32 %s60, 1
      %s62 = scalar_select %p59, %s60, %s61
      %p65 = pneg %p59
      %p66 = scmp.eq.s32.totalorder %s12, 1
      %p67 = por %p65, %p66
      %p68 = scmp.ne.s32.totalorder %s60, %s63
      %p69 = scmp.eq.s32.totalorder %s12, 0
      %p70 = por %p68, %p69
      %p71 = scmp.ne.s32.totalorder %s60, %s63
      %p72 = scmp.eq.s32.totalorder %s17, 1
      %p73 = por %p71, %p72
      %p74 = scmp.ne.s32.totalorder %s63, %s64
      %p75 = scmp.eq.s32.totalorder %s17, 0
      %p76 = por %p74, %p75
      %p77 = scmp.ne.s32.totalorder %s63, %s64
      %p78 = scmp.eq.s32.totalorder %s18, 1
      %p79 = por %p77, %p78
      %p81 = scmp.ne.s32.totalorder %s64, %s80
      %p82 = scmp.eq.s32.totalorder %s18, 0
      %p83 = por %p81, %p82
      %s84 = ssub.s32 %s20, %s27
      %p85 = scmp.eq.s32.totalorder %s84, 0
      %s87 = sadd.s32 %s86, 1
      %s88 = scalar_select %p85, %s86, %s87
      %p91 = pneg %p85
      %p92 = scmp.eq.s32.totalorder %s12, 1
      %p93 = por %p91, %p92
      %p94 = scmp.ne.s32.totalorder %s86, %s89
      %p95 = scmp.eq.s32.totalorder %s12, 0
      %p96 = por %p94, %p95
      %p97 = scmp.ne.s32.totalorder %s86, %s89
      %p98 = scmp.eq.s32.totalorder %s17, 1
      %p99 = por %p97, %p98
      %p100 = scmp.ne.s32.totalorder %s89, %s90
      %p101 = scmp.eq.s32.totalorder %s17, 0
      %p102 = por %p100, %p101
      %p103 = scmp.ne.s32.totalorder %s89, %s90
      %p104 = scmp.eq.s32.totalorder %s18, 1
      %p105 = por %p103, %p104
      %p107 = scmp.ne.s32.totalorder %s90, %s106
      %p108 = scmp.eq.s32.totalorder %s18, 0
      %p109 = por %p107, %p108
      %s110 = ssub.s32 %s19, %s31
      %s111 = ssub.s32 %s20, %s27
      %s112 = sor.u32 %s110, %s111
      %p113 = scmp.eq.s32.totalorder %s112, 0
      %s115 = sadd.s32 %s114, 1
      %s116 = scalar_select %p113, %s114, %s115
      %p119 = pneg %p113
      %p120 = scmp.eq.s32.totalorder %s12, 1
      %p121 = por %p119, %p120
      %p122 = scmp.ne.s32.totalorder %s114, %s117
      %p123 = scmp.eq.s32.totalorder %s12, 0
      %p124 = por %p122, %p123
      %p125 = scmp.ne.s32.totalorder %s114, %s117
      %p126 = scmp.eq.s32.totalorder %s17, 1
      %p127 = por %p125, %p126
      %p128 = scmp.ne.s32.totalorder %s117, %s118
      %p129 = scmp.eq.s32.totalorder %s17, 0
      %p130 = por %p128, %p129
      %p131 = scmp.ne.s32.totalorder %s117, %s118
      %p132 = scmp.eq.s32.totalorder %s18, 1
      %p133 = por %p131, %p132
      %p135 = scmp.ne.s32.totalorder %s118, %s134
      %p136 = scmp.eq.s32.totalorder %s18, 0
      %p137 = por %p135, %p136
      %p138 = scmp.le.s32.totalorder 1, %s12
      %p139 = scmp.lt.s32.totalorder %s12, 3
      %p140 = pnand %p138, %p139
      %p141 = pneg %p140
      // Predicated region
      $region9: #{tpu_custom_call.1} parent=5 // pred_check
        _
      $region10: #{tpu_custom_call.1} parent=5 // pred_check_branch
        %143 = sbr.rel (%p140) target = $region12
      $region11: #{tpu_custom_call.1} parent=5 // pred_region
        %s144 = ssub.s32 %s12, 1
        // Predicated region
        $region13: #{tpu_custom_call.1} parent=11 // pred_check
          %p145 = pneg %p76
        $region14: #{tpu_custom_call.1} parent=11 // pred_check_branch
          %147 = sbr.rel (%p145) target = $region16
        $region15: #{tpu_custom_call.1} parent=11 // pred_region
          %p148 = scmp.lt.s32.totalorder %s22, 0
          %s149 = scalar_select %p148, %s22, 0
          %s150 = smul.addr %s149, 4
          %s151 = scalar_lea.vmem %s1, %s150
        $region16: #{tpu_custom_call.1} parent=11 // pred_fallthru
          _
        // Predicated region
        $region17: #{tpu_custom_call.1} parent=11 // pred_check
          %p152 = pneg %p102
        $region18: #{tpu_custom_call.1} parent=11 // pred_check_branch
          %154 = sbr.rel (%p152) target = $region20
        $region19: #{tpu_custom_call.1} parent=11 // pred_region
          %p155 = scmp.lt.s32.totalorder %s22, 0
          %s156 = scalar_select %p155, %s22, 0
          %s157 = scalar_lea.vmem %s2, %s156
        $region20: #{tpu_custom_call.1} parent=11 // pred_fallthru
          _
      $region12: #{tpu_custom_call.1} parent=5 // pred_fallthru
        _
      %p158 = scmp.lt.s32.totalorder %s12, 2
      // Predicated region
      $region21: #{tpu_custom_call.1} parent=5 // pred_check
        %p159 = pneg %p158
      $region22: #{tpu_custom_call.1} parent=5 // pred_check_branch
        %161 = sbr.rel (%p159) target = $region24
      $region23: #{tpu_custom_call.1} parent=5 // pred_region
        // Predicated region
        $region25: #{tpu_custom_call.1} parent=23 // pred_check
          %p162 = pneg %p44
        $region26: #{tpu_custom_call.1} parent=23 // pred_check_branch
          %164 = sbr.rel (%p162) target = $region28
        $region27: #{tpu_custom_call.1} parent=23 // pred_region
          %s165 = smul.u32 32, %s19
          %p166 = scmp.lt.s32.totalorder %s165, 63
          %s167 = scalar_select %p166, %s165, 63
          %s168 = smul.addr %s167, 4
          %s169 = scalar_lea.vmem %s0, %s168
          %s170 = smul.u32 32, %s19
        $region28: #{tpu_custom_call.1} parent=23 // pred_fallthru
          _
      $region24: #{tpu_custom_call.1} parent=5 // pred_fallthru
        _
      %p171 = scmp.le.s32.totalorder 1, %s12
      %p172 = scmp.lt.s32.totalorder %s12, 3
      %p173 = pnand %p171, %p172
      %p174 = pneg %p173
      // Predicated region
      $region29: #{tpu_custom_call.1} parent=5 // pred_check
        _
      $region30: #{tpu_custom_call.1} parent=5 // pred_check_branch
        %176 = sbr.rel (%p173) target = $region32
      $region31: #{tpu_custom_call.1} parent=5 // pred_region
        %s177 = ssub.s32 %s12, 1
        %s178 = smul.u32 32, %s21
        %p179 = scmp.lt.s32.totalorder %s178, 63
        %s180 = scalar_select %p179, %s178, 63
        %s181 = smul.addr %s180, 4
        %s182 = scalar_lea.vmem %s0, %s181
        %p183 = pneg %p50
        %p184 = pneg %p47
        %p185 = scmp.lt.s32.totalorder %s22, 0
        %s186 = scalar_select %p185, %s22, 0
        %s187 = smul.addr %s186, 4
        %s188 = scalar_lea.vmem %s1, %s187
        %p189 = pneg %p76
        %p190 = pneg %p73
        %p191 = scmp.lt.s32.totalorder %s22, 0
        %s192 = scalar_select %p191, %s22, 0
        %s193 = scalar_lea.vmem %s2, %s192
        %p194 = pneg %p102
        %p195 = pneg %p99
        %p196 = pneg %p130
        %p197 = pneg %p127
        %s198 = sand.u32 %s117, 1
        %s199 = scalar_lea.sflag [#allocation3], %s198
        %s200 = sand.u32 %s117, 1
        %s201 = smul.addr %s200, 256
        %s202 = scalar_lea.vmem [#allocation2], %s201
        %s203 = smul.u32 32, %s21
        %p204 = scmp.lt.s32.totalorder %s203, 63
        %s205 = scalar_select %p204, %s203, 63
        %s206 = smul.addr %s205, 4
        %s207 = scalar_lea.vmem %s0, %s206
        %s208 = smul.u32 32, %s21
        %p209 = scmp.lt.s32.totalorder %s22, 0
        %s210 = scalar_select %p209, %s22, 0
        %s211 = smul.addr %s210, 4
        %s212 = scalar_lea.vmem %s1, %s211
        %p213 = scmp.lt.s32.totalorder %s22, 0
        %s214 = scalar_select %p213, %s22, 0
        %s215 = scalar_lea.vmem %s2, %s214
        %s216 = smul.u32 32, %s21
        %v218 = vld [vmem:[%s207] sm:$0xf]
        %v219 = vld [vmem:[%s207 + $0x4] sm:$0xf]
        %v220 = vld [vmem:[%s207 + $0x8] sm:$0xf]
        %v221 = vld [vmem:[%s207 + $0xc] sm:$0xf]
        %v222 = vld [vmem:[%s207 + $0x10] sm:$0xf]
        %v223 = vld [vmem:[%s207 + $0x14] sm:$0xf]
        %v224 = vld [vmem:[%s207 + $0x18] sm:$0xf]
        %v225 = vld [vmem:[%s207 + $0x1c] sm:$0xf]
        %v226 = vld [vmem:[%s207 + $0x20] sm:$0xf]
        %v227 = vld [vmem:[%s207 + $0x24] sm:$0xf]
        %v228 = vld [vmem:[%s207 + $0x28] sm:$0xf]
        %v229 = vld [vmem:[%s207 + $0x2c] sm:$0xf]
        %v230 = vld [vmem:[%s207 + $0x30] sm:$0xf]
        %v231 = vld [vmem:[%s207 + $0x34] sm:$0xf]
        %v232 = vld [vmem:[%s207 + $0x38] sm:$0xf]
        %v233 = vld [vmem:[%s207 + $0x3c] sm:$0xf]
        %v234 = vld [vmem:[%s207 + $0x40] sm:$0xf]
        %v235 = vld [vmem:[%s207 + $0x44] sm:$0xf]
        %v236 = vld [vmem:[%s207 + $0x48] sm:$0xf]
        %v237 = vld [vmem:[%s207 + $0x4c] sm:$0xf]
        %v238 = vld [vmem:[%s207 + $0x50] sm:$0xf]
        %v239 = vld [vmem:[%s207 + $0x54] sm:$0xf]
        %v240 = vld [vmem:[%s207 + $0x58] sm:$0xf]
        %v241 = vld [vmem:[%s207 + $0x5c] sm:$0xf]
        %v242 = vld [vmem:[%s207 + $0x60] sm:$0xf]
        %v243 = vld [vmem:[%s207 + $0x64] sm:$0xf]
        %v244 = vld [vmem:[%s207 + $0x68] sm:$0xf]
        %v245 = vld [vmem:[%s207 + $0x6c] sm:$0xf]
        %v246 = vld [vmem:[%s207 + $0x70] sm:$0xf]
        %v247 = vld [vmem:[%s207 + $0x74] sm:$0xf]
        %v248 = vld [vmem:[%s207 + $0x78] sm:$0xf]
        %v249 = vld [vmem:[%s207 + $0x7c] sm:$0xf]
        %v250 = vld [vmem:[%s212] sm:$0xf]
        %v251 = vld [vmem:[%s212 + $0x4] sm:$0xf]
        %v252 = vld [vmem:[%s212 + $0x8] sm:$0xf]
        %v253 = vld [vmem:[%s212 + $0xc] sm:$0xf]
        %v254 = vld [vmem:[%s215] sm:$0x1]
        %v256 = vperm.slane %v254, 0
        %v290 = vunpack.c.l.b16 %v218
        %v291 = vunpack.c.l.b16 %v219
        %v292 = vunpack.c.l.b16 %v220
        %v293 = vunpack.c.l.b16 %v221
        %v294 = vunpack.c.l.b16 %v222
        %v295 = vunpack.c.l.b16 %v223
        %v296 = vunpack.c.l.b16 %v224
        %v297 = vunpack.c.l.b16 %v225
        %v298 = vunpack.c.l.b16 %v226
        %v299 = vunpack.c.l.b16 %v227
        %v300 = vunpack.c.l.b16 %v228
        %v301 = vunpack.c.l.b16 %v229
        %v302 = vunpack.c.l.b16 %v230
        %v303 = vunpack.c.l.b16 %v231
        %v304 = vunpack.c.l.b16 %v232
        %v305 = vunpack.c.l.b16 %v233
        %v306 = vunpack.c.l.b16 %v234
        %v307 = vunpack.c.l.b16 %v235
        %v308 = vunpack.c.l.b16 %v236
        %v309 = vunpack.c.l.b16 %v237
        %v310 = vunpack.c.l.b16 %v238
        %v311 = vunpack.c.l.b16 %v239
        %v312 = vunpack.c.l.b16 %v240
        %v313 = vunpack.c.l.b16 %v241
        %v314 = vunpack.c.l.b16 %v242
        %v315 = vunpack.c.l.b16 %v243
        %v316 = vunpack.c.l.b16 %v244
        %v317 = vunpack.c.l.b16 %v245
        %v318 = vunpack.c.l.b16 %v246
        %v319 = vunpack.c.l.b16 %v247
        %v320 = vunpack.c.l.b16 %v248
        %v321 = vunpack.c.l.b16 %v249
        %v322 = vpack.c.b16 %v291, %v290
        %v323 = vpack.c.b16 %v293, %v292
        %v324 = vpack.c.b16 %v295, %v294
        %v325 = vpack.c.b16 %v297, %v296
        %v326 = vpack.c.b16 %v299, %v298
        %v327 = vpack.c.b16 %v301, %v300
        %v328 = vpack.c.b16 %v303, %v302
        %v329 = vpack.c.b16 %v305, %v304
        %v330 = vpack.c.b16 %v307, %v306
        %v331 = vpack.c.b16 %v309, %v308
        %v332 = vpack.c.b16 %v311, %v310
        %v333 = vpack.c.b16 %v313, %v312
        %v334 = vpack.c.b16 %v315, %v314
        %v335 = vpack.c.b16 %v317, %v316
        %v336 = vpack.c.b16 %v319, %v318
        %v337 = vpack.c.b16 %v321, %v320
        %v342 = vunpack.c.l.b16 %v250
        %v343 = vunpack.c.l.b16 %v251
        %v344 = vunpack.c.l.b16 %v252
        %v345 = vunpack.c.l.b16 %v253
        %v346 = vpack.c.b16 %v343, %v342
        %v347 = vpack.c.b16 %v345, %v344
        %vm350 = vcmask 261120
        %v352 = vsel %vm350, %v322, 0
        %v355 = vsel %vm350, %v323, 0
        %v358 = vsel %vm350, %v324, 0
        %v361 = vsel %vm350, %v325, 0
        %v364 = vsel %vm350, %v326, 0
        %v367 = vsel %vm350, %v327, 0
        %v370 = vsel %vm350, %v328, 0
        %v373 = vsel %vm350, %v329, 0
        %v376 = vsel %vm350, %v330, 0
        %v379 = vsel %vm350, %v331, 0
        %v382 = vsel %vm350, %v332, 0
        %v385 = vsel %vm350, %v333, 0
        %v388 = vsel %vm350, %v334, 0
        %v391 = vsel %vm350, %v335, 0
        %v394 = vsel %vm350, %v336, 0
        %v397 = vsel %vm350, %v337, 0
        %399 = vmatpush.bf16.msra.mxu0 0
        %400 = vmatpush.bf16.msra.mxu0 0
        %401 = vmatpush.bf16.msra.mxu0 0
        %402 = vmatpush.bf16.msra.mxu0 0
        %403 = vmatpush.bf16.msra.mxu0 0
        %404 = vmatpush.bf16.msra.mxu0 0
        %405 = vmatpush.bf16.msra.mxu0 %v347
        %406 = vmatpush.bf16.msra.mxu0 %v346
        %407 = vmatmul.bf16.gmra.mxu0 %v352
        %v408 = vpop.f32.mrf.mxu0
        %v409 = vadd.f32 %v256, %v408
        %v410 = vpop.f32.mrf.mxu0
        %v411 = vadd.f32 %v256, %v410
        %412 = vmatmul.bf16.gmra.mxu0 %v355
        %v413 = vpop.f32.mrf.mxu0
        %v414 = vadd.f32 %v256, %v413
        %v415 = vpop.f32.mrf.mxu0
        %v416 = vadd.f32 %v256, %v415
        %417 = vmatmul.bf16.gmra.mxu0 %v358
        %v418 = vpop.f32.mrf.mxu0
        %v419 = vadd.f32 %v256, %v418
        %v420 = vpop.f32.mrf.mxu0
        %v421 = vadd.f32 %v256, %v420
        %422 = vmatmul.bf16.gmra.mxu0 %v361
        %v423 = vpop.f32.mrf.mxu0
        %v424 = vadd.f32 %v256, %v423
        %v425 = vpop.f32.mrf.mxu0
        %v426 = vadd.f32 %v256, %v425
        %427 = vmatmul.bf16.gmra.mxu0 %v364
        %v428 = vpop.f32.mrf.mxu0
        %v429 = vadd.f32 %v256, %v428
        %v430 = vpop.f32.mrf.mxu0
        %v431 = vadd.f32 %v256, %v430
        %432 = vmatmul.bf16.gmra.mxu0 %v367
        %v433 = vpop.f32.mrf.mxu0
        %v434 = vadd.f32 %v256, %v433
        %v435 = vpop.f32.mrf.mxu0
        %v436 = vadd.f32 %v256, %v435
        %437 = vmatmul.bf16.gmra.mxu0 %v370
        %v438 = vpop.f32.mrf.mxu0
        %v439 = vadd.f32 %v256, %v438
        %v440 = vpop.f32.mrf.mxu0
        %v441 = vadd.f32 %v256, %v440
        %442 = vmatmul.bf16.gmra.mxu0 %v373
        %v443 = vpop.f32.mrf.mxu0
        %v444 = vadd.f32 %v256, %v443
        %v445 = vpop.f32.mrf.mxu0
        %v446 = vadd.f32 %v256, %v445
        %447 = vmatmul.bf16.gmra.mxu0 %v376
        %v448 = vpop.f32.mrf.mxu0
        %v449 = vadd.f32 %v256, %v448
        %v450 = vpop.f32.mrf.mxu0
        %v451 = vadd.f32 %v256, %v450
        %452 = vmatmul.bf16.gmra.mxu0 %v379
        %v453 = vpop.f32.mrf.mxu0
        %v454 = vadd.f32 %v256, %v453
        %v455 = vpop.f32.mrf.mxu0
        %v456 = vadd.f32 %v256, %v455
        %457 = vmatmul.bf16.gmra.mxu0 %v382
        %v458 = vpop.f32.mrf.mxu0
        %v459 = vadd.f32 %v256, %v458
        %v460 = vpop.f32.mrf.mxu0
        %v461 = vadd.f32 %v256, %v460
        %462 = vmatmul.bf16.gmra.mxu0 %v385
        %v463 = vpop.f32.mrf.mxu0
        %v464 = vadd.f32 %v256, %v463
        %v465 = vpop.f32.mrf.mxu0
        %v466 = vadd.f32 %v256, %v465
        %467 = vmatmul.bf16.gmra.mxu0 %v388
        %v468 = vpop.f32.mrf.mxu0
        %v469 = vadd.f32 %v256, %v468
        %v470 = vpop.f32.mrf.mxu0
        %v471 = vadd.f32 %v256, %v470
        %472 = vmatmul.bf16.gmra.mxu0 %v391
        %v473 = vpop.f32.mrf.mxu0
        %v474 = vadd.f32 %v256, %v473
        %v475 = vpop.f32.mrf.mxu0
        %v476 = vadd.f32 %v256, %v475
        %477 = vmatmul.bf16.gmra.mxu0 %v394
        %v478 = vpop.f32.mrf.mxu0
        %v479 = vadd.f32 %v256, %v478
        %v480 = vpop.f32.mrf.mxu0
        %v481 = vadd.f32 %v256, %v480
        %482 = vmatmul.bf16.gmra.mxu0 %v397
        %v483 = vpop.f32.mrf.mxu0
        %v484 = vadd.f32 %v256, %v483
        %v485 = vpop.f32.mrf.mxu0
        %v486 = vadd.f32 %v256, %v485
        %487 = vdwg.mxu0
        %v488 = vxor.u32 %v409, 2147483648
        %v489 = vxor.u32 %v411, 2147483648
        %v490 = vxor.u32 %v414, 2147483648
        %v491 = vxor.u32 %v416, 2147483648
        %v492 = vxor.u32 %v419, 2147483648
        %v493 = vxor.u32 %v421, 2147483648
        %v494 = vxor.u32 %v424, 2147483648
        %v495 = vxor.u32 %v426, 2147483648
        %v496 = vxor.u32 %v429, 2147483648
        %v497 = vxor.u32 %v431, 2147483648
        %v498 = vxor.u32 %v434, 2147483648
        %v499 = vxor.u32 %v436, 2147483648
        %v500 = vxor.u32 %v439, 2147483648
        %v501 = vxor.u32 %v441, 2147483648
        %v502 = vxor.u32 %v444, 2147483648
        %v503 = vxor.u32 %v446, 2147483648
        %v504 = vxor.u32 %v449, 2147483648
        %v505 = vxor.u32 %v451, 2147483648
        %v506 = vxor.u32 %v454, 2147483648
        %v507 = vxor.u32 %v456, 2147483648
        %v508 = vxor.u32 %v459, 2147483648
        %v509 = vxor.u32 %v461, 2147483648
        %v510 = vxor.u32 %v464, 2147483648
        %v511 = vxor.u32 %v466, 2147483648
        %v512 = vxor.u32 %v469, 2147483648
        %v513 = vxor.u32 %v471, 2147483648
        %v514 = vxor.u32 %v474, 2147483648
        %v515 = vxor.u32 %v476, 2147483648
        %v516 = vxor.u32 %v479, 2147483648
        %v517 = vxor.u32 %v481, 2147483648
        %v518 = vxor.u32 %v484, 2147483648
        %v519 = vxor.u32 %v486, 2147483648
        %v520 = vmul.f32 %v488, 1.442695
        %v521 = vpow.pop %v520
        %v522 = vmul.f32 %v489, 1.442695
        %v523 = vpow.pop %v522
        %v524 = vmul.f32 %v490, 1.442695
        %v525 = vpow.pop %v524
        %v526 = vmul.f32 %v491, 1.442695
        %v527 = vpow.pop %v526
        %v528 = vmul.f32 %v492, 1.442695
        %v529 = vpow.pop %v528
        %v530 = vmul.f32 %v493, 1.442695
        %v531 = vpow.pop %v530
        %v532 = vmul.f32 %v494, 1.442695
        %v533 = vpow.pop %v532
        %v534 = vmul.f32 %v495, 1.442695
        %v535 = vpow.pop %v534
        %v536 = vmul.f32 %v496, 1.442695
        %v537 = vpow.pop %v536
        %v538 = vmul.f32 %v497, 1.442695
        %v539 = vpow.pop %v538
        %v540 = vmul.f32 %v498, 1.442695
        %v541 = vpow.pop %v540
        %v542 = vmul.f32 %v499, 1.442695
        %v543 = vpow.pop %v542
        %v544 = vmul.f32 %v500, 1.442695
        %v545 = vpow.pop %v544
        %v546 = vmul.f32 %v501, 1.442695
        %v547 = vpow.pop %v546
        %v548 = vmul.f32 %v502, 1.442695
        %v549 = vpow.pop %v548
        %v550 = vmul.f32 %v503, 1.442695
        %v551 = vpow.pop %v550
        %v552 = vmul.f32 %v504, 1.442695
        %v553 = vpow.pop %v552
        %v554 = vmul.f32 %v505, 1.442695
        %v555 = vpow.pop %v554
        %v556 = vmul.f32 %v506, 1.442695
        %v557 = vpow.pop %v556
        %v558 = vmul.f32 %v507, 1.442695
        %v559 = vpow.pop %v558
        %v560 = vmul.f32 %v508, 1.442695
        %v561 = vpow.pop %v560
        %v562 = vmul.f32 %v509, 1.442695
        %v563 = vpow.pop %v562
        %v564 = vmul.f32 %v510, 1.442695
        %v565 = vpow.pop %v564
        %v566 = vmul.f32 %v511, 1.442695
        %v567 = vpow.pop %v566
        %v568 = vmul.f32 %v512, 1.442695
        %v569 = vpow.pop %v568
        %v570 = vmul.f32 %v513, 1.442695
        %v571 = vpow.pop %v570
        %v572 = vmul.f32 %v514, 1.442695
        %v573 = vpow.pop %v572
        %v574 = vmul.f32 %v515, 1.442695
        %v575 = vpow.pop %v574
        %v576 = vmul.f32 %v516, 1.442695
        %v577 = vpow.pop %v576
        %v578 = vmul.f32 %v517, 1.442695
        %v579 = vpow.pop %v578
        %v580 = vmul.f32 %v518, 1.442695
        %v581 = vpow.pop %v580
        %v582 = vmul.f32 %v519, 1.442695
        %v583 = vpow.pop %v582
        %v584 = vadd.f32 %v521, 1.0
        %v585 = vadd.f32 %v523, 1.0
        %v586 = vadd.f32 %v525, 1.0
        %v587 = vadd.f32 %v527, 1.0
        %v588 = vadd.f32 %v529, 1.0
        %v589 = vadd.f32 %v531, 1.0
        %v590 = vadd.f32 %v533, 1.0
        %v591 = vadd.f32 %v535, 1.0
        %v592 = vadd.f32 %v537, 1.0
        %v593 = vadd.f32 %v539, 1.0
        %v594 = vadd.f32 %v541, 1.0
        %v595 = vadd.f32 %v543, 1.0
        %v596 = vadd.f32 %v545, 1.0
        %v597 = vadd.f32 %v547, 1.0
        %v598 = vadd.f32 %v549, 1.0
        %v599 = vadd.f32 %v551, 1.0
        %v600 = vadd.f32 %v553, 1.0
        %v601 = vadd.f32 %v555, 1.0
        %v602 = vadd.f32 %v557, 1.0
        %v603 = vadd.f32 %v559, 1.0
        %v604 = vadd.f32 %v561, 1.0
        %v605 = vadd.f32 %v563, 1.0
        %v606 = vadd.f32 %v565, 1.0
        %v607 = vadd.f32 %v567, 1.0
        %v608 = vadd.f32 %v569, 1.0
        %v609 = vadd.f32 %v571, 1.0
        %v610 = vadd.f32 %v573, 1.0
        %v611 = vadd.f32 %v575, 1.0
        %v612 = vadd.f32 %v577, 1.0
        %v613 = vadd.f32 %v579, 1.0
        %v614 = vadd.f32 %v581, 1.0
        %v615 = vadd.f32 %v583, 1.0
        %v616 = vrcp.pop %v584
        %v617 = vmul.f32 %v584, %v616
        %v618 = vsub.f32 1.0, %v617
        %v619 = vmul.f32 %v616, %v618
        %v620 = vadd.f32 %v616, %v619
        %vm621 = vweird.f32 %v584
        %vm622 = vweird.f32 %v616
        %vm623 = vmor %vm621, %vm622
        %v624 = vsel %vm623, %v616, %v620
        %v625 = vand.u32 2147483647, %v584
        %vm626 = vcmp.eq.f32.partialorder %v625, 8.507059e+37
        %v627 = vand.u32 %v584, 2147483648
        %v628 = vor.u32 1.1754944e-38, %v627
        %v629 = vsel %vm626, %v628, %v624
        %v630 = vmul.f32 1.0, %v629
        %v631 = vrcp.pop %v585
        %v632 = vmul.f32 %v585, %v631
        %v633 = vsub.f32 1.0, %v632
        %v634 = vmul.f32 %v631, %v633
        %v635 = vadd.f32 %v631, %v634
        %vm636 = vweird.f32 %v585
        %vm637 = vweird.f32 %v631
        %vm638 = vmor %vm636, %vm637
        %v639 = vsel %vm638, %v631, %v635
        %v640 = vand.u32 2147483647, %v585
        %vm641 = vcmp.eq.f32.partialorder %v640, 8.507059e+37
        %v642 = vand.u32 %v585, 2147483648
        %v643 = vor.u32 1.1754944e-38, %v642
        %v644 = vsel %vm641, %v643, %v639
        %v645 = vmul.f32 1.0, %v644
        %v646 = vrcp.pop %v586
        %v647 = vmul.f32 %v586, %v646
        %v648 = vsub.f32 1.0, %v647
        %v649 = vmul.f32 %v646, %v648
        %v650 = vadd.f32 %v646, %v649
        %vm651 = vweird.f32 %v586
        %vm652 = vweird.f32 %v646
        %vm653 = vmor %vm651, %vm652
        %v654 = vsel %vm653, %v646, %v650
        %v655 = vand.u32 2147483647, %v586
        %vm656 = vcmp.eq.f32.partialorder %v655, 8.507059e+37
        %v657 = vand.u32 %v586, 2147483648
        %v658 = vor.u32 1.1754944e-38, %v657
        %v659 = vsel %vm656, %v658, %v654
        %v660 = vmul.f32 1.0, %v659
        %v661 = vrcp.pop %v587
        %v662 = vmul.f32 %v587, %v661
        %v663 = vsub.f32 1.0, %v662
        %v664 = vmul.f32 %v661, %v663
        %v665 = vadd.f32 %v661, %v664
        %vm666 = vweird.f32 %v587
        %vm667 = vweird.f32 %v661
        %vm668 = vmor %vm666, %vm667
        %v669 = vsel %vm668, %v661, %v665
        %v670 = vand.u32 2147483647, %v587
        %vm671 = vcmp.eq.f32.partialorder %v670, 8.507059e+37
        %v672 = vand.u32 %v587, 2147483648
        %v673 = vor.u32 1.1754944e-38, %v672
        %v674 = vsel %vm671, %v673, %v669
        %v675 = vmul.f32 1.0, %v674
        %v676 = vrcp.pop %v588
        %v677 = vmul.f32 %v588, %v676
        %v678 = vsub.f32 1.0, %v677
        %v679 = vmul.f32 %v676, %v678
        %v680 = vadd.f32 %v676, %v679
        %vm681 = vweird.f32 %v588
        %vm682 = vweird.f32 %v676
        %vm683 = vmor %vm681, %vm682
        %v684 = vsel %vm683, %v676, %v680
        %v685 = vand.u32 2147483647, %v588
        %vm686 = vcmp.eq.f32.partialorder %v685, 8.507059e+37
        %v687 = vand.u32 %v588, 2147483648
        %v688 = vor.u32 1.1754944e-38, %v687
        %v689 = vsel %vm686, %v688, %v684
        %v690 = vmul.f32 1.0, %v689
        %v691 = vrcp.pop %v589
        %v692 = vmul.f32 %v589, %v691
        %v693 = vsub.f32 1.0, %v692
        %v694 = vmul.f32 %v691, %v693
        %v695 = vadd.f32 %v691, %v694
        %vm696 = vweird.f32 %v589
        %vm697 = vweird.f32 %v691
        %vm698 = vmor %vm696, %vm697
        %v699 = vsel %vm698, %v691, %v695
        %v700 = vand.u32 2147483647, %v589
        %vm701 = vcmp.eq.f32.partialorder %v700, 8.507059e+37
        %v702 = vand.u32 %v589, 2147483648
        %v703 = vor.u32 1.1754944e-38, %v702
        %v704 = vsel %vm701, %v703, %v699
        %v705 = vmul.f32 1.0, %v704
        %v706 = vrcp.pop %v590
        %v707 = vmul.f32 %v590, %v706
        %v708 = vsub.f32 1.0, %v707
        %v709 = vmul.f32 %v706, %v708
        %v710 = vadd.f32 %v706, %v709
        %vm711 = vweird.f32 %v590
        %vm712 = vweird.f32 %v706
        %vm713 = vmor %vm711, %vm712
        %v714 = vsel %vm713, %v706, %v710
        %v715 = vand.u32 2147483647, %v590
        %vm716 = vcmp.eq.f32.partialorder %v715, 8.507059e+37
        %v717 = vand.u32 %v590, 2147483648
        %v718 = vor.u32 1.1754944e-38, %v717
        %v719 = vsel %vm716, %v718, %v714
        %v720 = vmul.f32 1.0, %v719
        %v721 = vrcp.pop %v591
        %v722 = vmul.f32 %v591, %v721
        %v723 = vsub.f32 1.0, %v722
        %v724 = vmul.f32 %v721, %v723
        %v725 = vadd.f32 %v721, %v724
        %vm726 = vweird.f32 %v591
        %vm727 = vweird.f32 %v721
        %vm728 = vmor %vm726, %vm727
        %v729 = vsel %vm728, %v721, %v725
        %v730 = vand.u32 2147483647, %v591
        %vm731 = vcmp.eq.f32.partialorder %v730, 8.507059e+37
        %v732 = vand.u32 %v591, 2147483648
        %v733 = vor.u32 1.1754944e-38, %v732
        %v734 = vsel %vm731, %v733, %v729
        %v735 = vmul.f32 1.0, %v734
        %v736 = vrcp.pop %v592
        %v737 = vmul.f32 %v592, %v736
        %v738 = vsub.f32 1.0, %v737
        %v739 = vmul.f32 %v736, %v738
        %v740 = vadd.f32 %v736, %v739
        %vm741 = vweird.f32 %v592
        %vm742 = vweird.f32 %v736
        %vm743 = vmor %vm741, %vm742
        %v744 = vsel %vm743, %v736, %v740
        %v745 = vand.u32 2147483647, %v592
        %vm746 = vcmp.eq.f32.partialorder %v745, 8.507059e+37
        %v747 = vand.u32 %v592, 2147483648
        %v748 = vor.u32 1.1754944e-38, %v747
        %v749 = vsel %vm746, %v748, %v744
        %v750 = vmul.f32 1.0, %v749
        %v751 = vrcp.pop %v593
        %v752 = vmul.f32 %v593, %v751
        %v753 = vsub.f32 1.0, %v752
        %v754 = vmul.f32 %v751, %v753
        %v755 = vadd.f32 %v751, %v754
        %vm756 = vweird.f32 %v593
        %vm757 = vweird.f32 %v751
        %vm758 = vmor %vm756, %vm757
        %v759 = vsel %vm758, %v751, %v755
        %v760 = vand.u32 2147483647, %v593
        %vm761 = vcmp.eq.f32.partialorder %v760, 8.507059e+37
        %v762 = vand.u32 %v593, 2147483648
        %v763 = vor.u32 1.1754944e-38, %v762
        %v764 = vsel %vm761, %v763, %v759
        %v765 = vmul.f32 1.0, %v764
        %v766 = vrcp.pop %v594
        %v767 = vmul.f32 %v594, %v766
        %v768 = vsub.f32 1.0, %v767
        %v769 = vmul.f32 %v766, %v768
        %v770 = vadd.f32 %v766, %v769
        %vm771 = vweird.f32 %v594
        %vm772 = vweird.f32 %v766
        %vm773 = vmor %vm771, %vm772
        %v774 = vsel %vm773, %v766, %v770
        %v775 = vand.u32 2147483647, %v594
        %vm776 = vcmp.eq.f32.partialorder %v775, 8.507059e+37
        %v777 = vand.u32 %v594, 2147483648
        %v778 = vor.u32 1.1754944e-38, %v777
        %v779 = vsel %vm776, %v778, %v774
        %v780 = vmul.f32 1.0, %v779
        %v781 = vrcp.pop %v595
        %v782 = vmul.f32 %v595, %v781
        %v783 = vsub.f32 1.0, %v782
        %v784 = vmul.f32 %v781, %v783
        %v785 = vadd.f32 %v781, %v784
        %vm786 = vweird.f32 %v595
        %vm787 = vweird.f32 %v781
        %vm788 = vmor %vm786, %vm787
        %v789 = vsel %vm788, %v781, %v785
        %v790 = vand.u32 2147483647, %v595
        %vm791 = vcmp.eq.f32.partialorder %v790, 8.507059e+37
        %v792 = vand.u32 %v595, 2147483648
        %v793 = vor.u32 1.1754944e-38, %v792
        %v794 = vsel %vm791, %v793, %v789
        %v795 = vmul.f32 1.0, %v794
        %v796 = vrcp.pop %v596
        %v797 = vmul.f32 %v596, %v796
        %v798 = vsub.f32 1.0, %v797
        %v799 = vmul.f32 %v796, %v798
        %v800 = vadd.f32 %v796, %v799
        %vm801 = vweird.f32 %v596
        %vm802 = vweird.f32 %v796
        %vm803 = vmor %vm801, %vm802
        %v804 = vsel %vm803, %v796, %v800
        %v805 = vand.u32 2147483647, %v596
        %vm806 = vcmp.eq.f32.partialorder %v805, 8.507059e+37
        %v807 = vand.u32 %v596, 2147483648
        %v808 = vor.u32 1.1754944e-38, %v807
        %v809 = vsel %vm806, %v808, %v804
        %v810 = vmul.f32 1.0, %v809
        %v811 = vrcp.pop %v597
        %v812 = vmul.f32 %v597, %v811
        %v813 = vsub.f32 1.0, %v812
        %v814 = vmul.f32 %v811, %v813
        %v815 = vadd.f32 %v811, %v814
        %vm816 = vweird.f32 %v597
        %vm817 = vweird.f32 %v811
        %vm818 = vmor %vm816, %vm817
        %v819 = vsel %vm818, %v811, %v815
        %v820 = vand.u32 2147483647, %v597
        %vm821 = vcmp.eq.f32.partialorder %v820, 8.507059e+37
        %v822 = vand.u32 %v597, 2147483648
        %v823 = vor.u32 1.1754944e-38, %v822
        %v824 = vsel %vm821, %v823, %v819
        %v825 = vmul.f32 1.0, %v824
        %v826 = vrcp.pop %v598
        %v827 = vmul.f32 %v598, %v826
        %v828 = vsub.f32 1.0, %v827
        %v829 = vmul.f32 %v826, %v828
        %v830 = vadd.f32 %v826, %v829
        %vm831 = vweird.f32 %v598
        %vm832 = vweird.f32 %v826
        %vm833 = vmor %vm831, %vm832
        %v834 = vsel %vm833, %v826, %v830
        %v835 = vand.u32 2147483647, %v598
        %vm836 = vcmp.eq.f32.partialorder %v835, 8.507059e+37
        %v837 = vand.u32 %v598, 2147483648
        %v838 = vor.u32 1.1754944e-38, %v837
        %v839 = vsel %vm836, %v838, %v834
        %v840 = vmul.f32 1.0, %v839
        %v841 = vrcp.pop %v599
        %v842 = vmul.f32 %v599, %v841
        %v843 = vsub.f32 1.0, %v842
        %v844 = vmul.f32 %v841, %v843
        %v845 = vadd.f32 %v841, %v844
        %vm846 = vweird.f32 %v599
        %vm847 = vweird.f32 %v841
        %vm848 = vmor %vm846, %vm847
        %v849 = vsel %vm848, %v841, %v845
        %v850 = vand.u32 2147483647, %v599
        %vm851 = vcmp.eq.f32.partialorder %v850, 8.507059e+37
        %v852 = vand.u32 %v599, 2147483648
        %v853 = vor.u32 1.1754944e-38, %v852
        %v854 = vsel %vm851, %v853, %v849
        %v855 = vmul.f32 1.0, %v854
        %v856 = vrcp.pop %v600
        %v857 = vmul.f32 %v600, %v856
        %v858 = vsub.f32 1.0, %v857
        %v859 = vmul.f32 %v856, %v858
        %v860 = vadd.f32 %v856, %v859
        %vm861 = vweird.f32 %v600
        %vm862 = vweird.f32 %v856
        %vm863 = vmor %vm861, %vm862
        %v864 = vsel %vm863, %v856, %v860
        %v865 = vand.u32 2147483647, %v600
        %vm866 = vcmp.eq.f32.partialorder %v865, 8.507059e+37
        %v867 = vand.u32 %v600, 2147483648
        %v868 = vor.u32 1.1754944e-38, %v867
        %v869 = vsel %vm866, %v868, %v864
        %v870 = vmul.f32 1.0, %v869
        %v871 = vrcp.pop %v601
        %v872 = vmul.f32 %v601, %v871
        %v873 = vsub.f32 1.0, %v872
        %v874 = vmul.f32 %v871, %v873
        %v875 = vadd.f32 %v871, %v874
        %vm876 = vweird.f32 %v601
        %vm877 = vweird.f32 %v871
        %vm878 = vmor %vm876, %vm877
        %v879 = vsel %vm878, %v871, %v875
        %v880 = vand.u32 2147483647, %v601
        %vm881 = vcmp.eq.f32.partialorder %v880, 8.507059e+37
        %v882 = vand.u32 %v601, 2147483648
        %v883 = vor.u32 1.1754944e-38, %v882
        %v884 = vsel %vm881, %v883, %v879
        %v885 = vmul.f32 1.0, %v884
        %v886 = vrcp.pop %v602
        %v887 = vmul.f32 %v602, %v886
        %v888 = vsub.f32 1.0, %v887
        %v889 = vmul.f32 %v886, %v888
        %v890 = vadd.f32 %v886, %v889
        %vm891 = vweird.f32 %v602
        %vm892 = vweird.f32 %v886
        %vm893 = vmor %vm891, %vm892
        %v894 = vsel %vm893, %v886, %v890
        %v895 = vand.u32 2147483647, %v602
        %vm896 = vcmp.eq.f32.partialorder %v895, 8.507059e+37
        %v897 = vand.u32 %v602, 2147483648
        %v898 = vor.u32 1.1754944e-38, %v897
        %v899 = vsel %vm896, %v898, %v894
        %v900 = vmul.f32 1.0, %v899
        %v901 = vrcp.pop %v603
        %v902 = vmul.f32 %v603, %v901
        %v903 = vsub.f32 1.0, %v902
        %v904 = vmul.f32 %v901, %v903
        %v905 = vadd.f32 %v901, %v904
        %vm906 = vweird.f32 %v603
        %vm907 = vweird.f32 %v901
        %vm908 = vmor %vm906, %vm907
        %v909 = vsel %vm908, %v901, %v905
        %v910 = vand.u32 2147483647, %v603
        %vm911 = vcmp.eq.f32.partialorder %v910, 8.507059e+37
        %v912 = vand.u32 %v603, 2147483648
        %v913 = vor.u32 1.1754944e-38, %v912
        %v914 = vsel %vm911, %v913, %v909
        %v915 = vmul.f32 1.0, %v914
        %v916 = vrcp.pop %v604
        %v917 = vmul.f32 %v604, %v916
        %v918 = vsub.f32 1.0, %v917
        %v919 = vmul.f32 %v916, %v918
        %v920 = vadd.f32 %v916, %v919
        %vm921 = vweird.f32 %v604
        %vm922 = vweird.f32 %v916
        %vm923 = vmor %vm921, %vm922
        %v924 = vsel %vm923, %v916, %v920
        %v925 = vand.u32 2147483647, %v604
        %vm926 = vcmp.eq.f32.partialorder %v925, 8.507059e+37
        %v927 = vand.u32 %v604, 2147483648
        %v928 = vor.u32 1.1754944e-38, %v927
        %v929 = vsel %vm926, %v928, %v924
        %v930 = vmul.f32 1.0, %v929
        %v931 = vrcp.pop %v605
        %v932 = vmul.f32 %v605, %v931
        %v933 = vsub.f32 1.0, %v932
        %v934 = vmul.f32 %v931, %v933
        %v935 = vadd.f32 %v931, %v934
        %vm936 = vweird.f32 %v605
        %vm937 = vweird.f32 %v931
        %vm938 = vmor %vm936, %vm937
        %v939 = vsel %vm938, %v931, %v935
        %v940 = vand.u32 2147483647, %v605
        %vm941 = vcmp.eq.f32.partialorder %v940, 8.507059e+37
        %v942 = vand.u32 %v605, 2147483648
        %v943 = vor.u32 1.1754944e-38, %v942
        %v944 = vsel %vm941, %v943, %v939
        %v945 = vmul.f32 1.0, %v944
        %v946 = vrcp.pop %v606
        %v947 = vmul.f32 %v606, %v946
        %v948 = vsub.f32 1.0, %v947
        %v949 = vmul.f32 %v946, %v948
        %v950 = vadd.f32 %v946, %v949
        %vm951 = vweird.f32 %v606
        %vm952 = vweird.f32 %v946
        %vm953 = vmor %vm951, %vm952
        %v954 = vsel %vm953, %v946, %v950
        %v955 = vand.u32 2147483647, %v606
        %vm956 = vcmp.eq.f32.partialorder %v955, 8.507059e+37
        %v957 = vand.u32 %v606, 2147483648
        %v958 = vor.u32 1.1754944e-38, %v957
        %v959 = vsel %vm956, %v958, %v954
        %v960 = vmul.f32 1.0, %v959
        %v961 = vrcp.pop %v607
        %v962 = vmul.f32 %v607, %v961
        %v963 = vsub.f32 1.0, %v962
        %v964 = vmul.f32 %v961, %v963
        %v965 = vadd.f32 %v961, %v964
        %vm966 = vweird.f32 %v607
        %vm967 = vweird.f32 %v961
        %vm968 = vmor %vm966, %vm967
        %v969 = vsel %vm968, %v961, %v965
        %v970 = vand.u32 2147483647, %v607
        %vm971 = vcmp.eq.f32.partialorder %v970, 8.507059e+37
        %v972 = vand.u32 %v607, 2147483648
        %v973 = vor.u32 1.1754944e-38, %v972
        %v974 = vsel %vm971, %v973, %v969
        %v975 = vmul.f32 1.0, %v974
        %v976 = vrcp.pop %v608
        %v977 = vmul.f32 %v608, %v976
        %v978 = vsub.f32 1.0, %v977
        %v979 = vmul.f32 %v976, %v978
        %v980 = vadd.f32 %v976, %v979
        %vm981 = vweird.f32 %v608
        %vm982 = vweird.f32 %v976
        %vm983 = vmor %vm981, %vm982
        %v984 = vsel %vm983, %v976, %v980
        %v985 = vand.u32 2147483647, %v608
        %vm986 = vcmp.eq.f32.partialorder %v985, 8.507059e+37
        %v987 = vand.u32 %v608, 2147483648
        %v988 = vor.u32 1.1754944e-38, %v987
        %v989 = vsel %vm986, %v988, %v984
        %v990 = vmul.f32 1.0, %v989
        %v991 = vrcp.pop %v609
        %v992 = vmul.f32 %v609, %v991
        %v993 = vsub.f32 1.0, %v992
        %v994 = vmul.f32 %v991, %v993
        %v995 = vadd.f32 %v991, %v994
        %vm996 = vweird.f32 %v609
        %vm997 = vweird.f32 %v991
        %vm998 = vmor %vm996, %vm997
        %v999 = vsel %vm998, %v991, %v995
        %v1000 = vand.u32 2147483647, %v609
        %vm1001 = vcmp.eq.f32.partialorder %v1000, 8.507059e+37
        %v1002 = vand.u32 %v609, 2147483648
        %v1003 = vor.u32 1.1754944e-38, %v1002
        %v1004 = vsel %vm1001, %v1003, %v999
        %v1005 = vmul.f32 1.0, %v1004
        %v1006 = vrcp.pop %v610
        %v1007 = vmul.f32 %v610, %v1006
        %v1008 = vsub.f32 1.0, %v1007
        %v1009 = vmul.f32 %v1006, %v1008
        %v1010 = vadd.f32 %v1006, %v1009
        %vm1011 = vweird.f32 %v610
        %vm1012 = vweird.f32 %v1006
        %vm1013 = vmor %vm1011, %vm1012
        %v1014 = vsel %vm1013, %v1006, %v1010
        %v1015 = vand.u32 2147483647, %v610
        %vm1016 = vcmp.eq.f32.partialorder %v1015, 8.507059e+37
        %v1017 = vand.u32 %v610, 2147483648
        %v1018 = vor.u32 1.1754944e-38, %v1017
        %v1019 = vsel %vm1016, %v1018, %v1014
        %v1020 = vmul.f32 1.0, %v1019
        %v1021 = vrcp.pop %v611
        %v1022 = vmul.f32 %v611, %v1021
        %v1023 = vsub.f32 1.0, %v1022
        %v1024 = vmul.f32 %v1021, %v1023
        %v1025 = vadd.f32 %v1021, %v1024
        %vm1026 = vweird.f32 %v611
        %vm1027 = vweird.f32 %v1021
        %vm1028 = vmor %vm1026, %vm1027
        %v1029 = vsel %vm1028, %v1021, %v1025
        %v1030 = vand.u32 2147483647, %v611
        %vm1031 = vcmp.eq.f32.partialorder %v1030, 8.507059e+37
        %v1032 = vand.u32 %v611, 2147483648
        %v1033 = vor.u32 1.1754944e-38, %v1032
        %v1034 = vsel %vm1031, %v1033, %v1029
        %v1035 = vmul.f32 1.0, %v1034
        %v1036 = vrcp.pop %v612
        %v1037 = vmul.f32 %v612, %v1036
        %v1038 = vsub.f32 1.0, %v1037
        %v1039 = vmul.f32 %v1036, %v1038
        %v1040 = vadd.f32 %v1036, %v1039
        %vm1041 = vweird.f32 %v612
        %vm1042 = vweird.f32 %v1036
        %vm1043 = vmor %vm1041, %vm1042
        %v1044 = vsel %vm1043, %v1036, %v1040
        %v1045 = vand.u32 2147483647, %v612
        %vm1046 = vcmp.eq.f32.partialorder %v1045, 8.507059e+37
        %v1047 = vand.u32 %v612, 2147483648
        %v1048 = vor.u32 1.1754944e-38, %v1047
        %v1049 = vsel %vm1046, %v1048, %v1044
        %v1050 = vmul.f32 1.0, %v1049
        %v1051 = vrcp.pop %v613
        %v1052 = vmul.f32 %v613, %v1051
        %v1053 = vsub.f32 1.0, %v1052
        %v1054 = vmul.f32 %v1051, %v1053
        %v1055 = vadd.f32 %v1051, %v1054
        %vm1056 = vweird.f32 %v613
        %vm1057 = vweird.f32 %v1051
        %vm1058 = vmor %vm1056, %vm1057
        %v1059 = vsel %vm1058, %v1051, %v1055
        %v1060 = vand.u32 2147483647, %v613
        %vm1061 = vcmp.eq.f32.partialorder %v1060, 8.507059e+37
        %v1062 = vand.u32 %v613, 2147483648
        %v1063 = vor.u32 1.1754944e-38, %v1062
        %v1064 = vsel %vm1061, %v1063, %v1059
        %v1065 = vmul.f32 1.0, %v1064
        %v1066 = vrcp.pop %v614
        %v1067 = vmul.f32 %v614, %v1066
        %v1068 = vsub.f32 1.0, %v1067
        %v1069 = vmul.f32 %v1066, %v1068
        %v1070 = vadd.f32 %v1066, %v1069
        %vm1071 = vweird.f32 %v614
        %vm1072 = vweird.f32 %v1066
        %vm1073 = vmor %vm1071, %vm1072
        %v1074 = vsel %vm1073, %v1066, %v1070
        %v1075 = vand.u32 2147483647, %v614
        %vm1076 = vcmp.eq.f32.partialorder %v1075, 8.507059e+37
        %v1077 = vand.u32 %v614, 2147483648
        %v1078 = vor.u32 1.1754944e-38, %v1077
        %v1079 = vsel %vm1076, %v1078, %v1074
        %v1080 = vmul.f32 1.0, %v1079
        %v1081 = vrcp.pop %v615
        %v1082 = vmul.f32 %v615, %v1081
        %v1083 = vsub.f32 1.0, %v1082
        %v1084 = vmul.f32 %v1081, %v1083
        %v1085 = vadd.f32 %v1081, %v1084
        %vm1086 = vweird.f32 %v615
        %vm1087 = vweird.f32 %v1081
        %vm1088 = vmor %vm1086, %vm1087
        %v1089 = vsel %vm1088, %v1081, %v1085
        %v1090 = vand.u32 2147483647, %v615
        %vm1091 = vcmp.eq.f32.partialorder %v1090, 8.507059e+37
        %v1092 = vand.u32 %v615, 2147483648
        %v1093 = vor.u32 1.1754944e-38, %v1092
        %v1094 = vsel %vm1091, %v1093, %v1089
        %v1095 = vmul.f32 1.0, %v1094
        %v1096 = vmul.f32 %v409, %v630
        %v1097 = vmul.f32 %v411, %v645
        %v1098 = vmul.f32 %v414, %v660
        %v1099 = vmul.f32 %v416, %v675
        %v1100 = vmul.f32 %v419, %v690
        %v1101 = vmul.f32 %v421, %v705
        %v1102 = vmul.f32 %v424, %v720
        %v1103 = vmul.f32 %v426, %v735
        %v1104 = vmul.f32 %v429, %v750
        %v1105 = vmul.f32 %v431, %v765
        %v1106 = vmul.f32 %v434, %v780
        %v1107 = vmul.f32 %v436, %v795
        %v1108 = vmul.f32 %v439, %v810
        %v1109 = vmul.f32 %v441, %v825
        %v1110 = vmul.f32 %v444, %v840
        %v1111 = vmul.f32 %v446, %v855
        %v1112 = vmul.f32 %v449, %v870
        %v1113 = vmul.f32 %v451, %v885
        %v1114 = vmul.f32 %v454, %v900
        %v1115 = vmul.f32 %v456, %v915
        %v1116 = vmul.f32 %v459, %v930
        %v1117 = vmul.f32 %v461, %v945
        %v1118 = vmul.f32 %v464, %v960
        %v1119 = vmul.f32 %v466, %v975
        %v1120 = vmul.f32 %v469, %v990
        %v1121 = vmul.f32 %v471, %v1005
        %v1122 = vmul.f32 %v474, %v1020
        %v1123 = vmul.f32 %v476, %v1035
        %v1124 = vmul.f32 %v479, %v1050
        %v1125 = vmul.f32 %v481, %v1065
        %v1126 = vmul.f32 %v484, %v1080
        %v1127 = vmul.f32 %v486, %v1095
        %1128 = vst [vmem:[%s202] sm:$0xff] %v1096
        %1129 = vst [vmem:[%s202 + $0x8] sm:$0xff] %v1097
        %1130 = vst [vmem:[%s202 + $0x10] sm:$0xff] %v1098
        %1131 = vst [vmem:[%s202 + $0x18] sm:$0xff] %v1099
        %1132 = vst [vmem:[%s202 + $0x20] sm:$0xff] %v1100
        %1133 = vst [vmem:[%s202 + $0x28] sm:$0xff] %v1101
        %1134 = vst [vmem:[%s202 + $0x30] sm:$0xff] %v1102
        %1135 = vst [vmem:[%s202 + $0x38] sm:$0xff] %v1103
        %1136 = vst [vmem:[%s202 + $0x40] sm:$0xff] %v1104
        %1137 = vst [vmem:[%s202 + $0x48] sm:$0xff] %v1105
        %1138 = vst [vmem:[%s202 + $0x50] sm:$0xff] %v1106
        %1139 = vst [vmem:[%s202 + $0x58] sm:$0xff] %v1107
        %1140 = vst [vmem:[%s202 + $0x60] sm:$0xff] %v1108
        %1141 = vst [vmem:[%s202 + $0x68] sm:$0xff] %v1109
        %1142 = vst [vmem:[%s202 + $0x70] sm:$0xff] %v1110
        %1143 = vst [vmem:[%s202 + $0x78] sm:$0xff] %v1111
        %1144 = vst [vmem:[%s202 + $0x80] sm:$0xff] %v1112
        %1145 = vst [vmem:[%s202 + $0x88] sm:$0xff] %v1113
        %1146 = vst [vmem:[%s202 + $0x90] sm:$0xff] %v1114
        %1147 = vst [vmem:[%s202 + $0x98] sm:$0xff] %v1115
        %1148 = vst [vmem:[%s202 + $0xa0] sm:$0xff] %v1116
        %1149 = vst [vmem:[%s202 + $0xa8] sm:$0xff] %v1117
        %1150 = vst [vmem:[%s202 + $0xb0] sm:$0xff] %v1118
        %1151 = vst [vmem:[%s202 + $0xb8] sm:$0xff] %v1119
        %1152 = vst [vmem:[%s202 + $0xc0] sm:$0xff] %v1120
        %1153 = vst [vmem:[%s202 + $0xc8] sm:$0xff] %v1121
        %1154 = vst [vmem:[%s202 + $0xd0] sm:$0xff] %v1122
        %1155 = vst [vmem:[%s202 + $0xd8] sm:$0xff] %v1123
        %1156 = vst [vmem:[%s202 + $0xe0] sm:$0xff] %v1124
        %1157 = vst [vmem:[%s202 + $0xe8] sm:$0xff] %v1125
        %1158 = vst [vmem:[%s202 + $0xf0] sm:$0xff] %v1126
        %1159 = vst [vmem:[%s202 + $0xf8] sm:$0xff] %v1127
        %s1160 = sand.u32 %s117, 1
        %s1161 = scalar_lea.sflag [#allocation3], %s1160
        %s1162 = sand.u32 %s117, 1
        %s1163 = smul.addr %s1162, 256
        %s1164 = scalar_lea.vmem [#allocation2], %s1163
        // Predicated region
        $region33: #{tpu_custom_call.1} parent=31 // pred_check
          %p1165 = pneg %p127
        $region34: #{tpu_custom_call.1} parent=31 // pred_check_branch
          %1167 = sbr.rel (%p1165) target = $region36
        $region35: #{tpu_custom_call.1} parent=31 // pred_region
          %s1168 = smul.u32 32, %s21
          %1170 = vsyncadd %s1161, 0
          %s1171 = sadd.s32 %s22, %s1168
          %s1172 = smul.addr %s1171, 8
          %s1173 = scalar_lea.hbm %s3, %s1172
          %s1174 = sshll.u32 %s1164, 4
          %s1175 = int_to_ptr.vmem [resolvable:$true] %s1174
          %s1176 = sshll.u32 %s1173, 4
          %s1177 = int_to_ptr.hbm [resolvable:$true] %s1176
          %1182 = dma.vmem_to_hbm [thread:$0]  %s1175, 4096, %s1177, %s1161, 128, 128, 8
        $region36: #{tpu_custom_call.1} parent=31 // pred_fallthru
          _
      $region32: #{tpu_custom_call.1} parent=5 // pred_fallthru
        _
      %p1183 = scmp.le.s32.totalorder 2, %s12
      // Predicated region
      $region37: #{tpu_custom_call.1} parent=5 // pred_check
        %p1184 = pneg %p1183
      $region38: #{tpu_custom_call.1} parent=5 // pred_check_branch
        %1186 = sbr.rel (%p1184) target = $region40
      $region39: #{tpu_custom_call.1} parent=5 // pred_region
        %s1187 = ssub.s32 %s12, 2
        // Predicated region
        $region41: #{tpu_custom_call.1} parent=39 // pred_check
          %p1188 = pneg %p133
        $region42: #{tpu_custom_call.1} parent=39 // pred_check_branch
          %1190 = sbr.rel (%p1188) target = $region44
        $region43: #{tpu_custom_call.1} parent=39 // pred_region
          %s1191 = sand.u32 %s118, 1
          %s1192 = scalar_lea.sflag [#allocation3], %s1191
          %s1193 = sand.u32 %s118, 1
          %s1194 = smul.addr %s1193, 256
          %s1195 = scalar_lea.vmem [#allocation2], %s1194
          %1197 = dma.done %s1192, 4096
        $region44: #{tpu_custom_call.1} parent=39 // pred_fallthru
          _
      $region40: #{tpu_custom_call.1} parent=5 // pred_fallthru
        _
    $region6: #{tpu_custom_call.1} parent=1 // loop_footer
      %s16 = sadd.s32 1, %s12
    $region7: #{tpu_custom_call.1} parent=1 // loop_footer_branch
      %11 = sbr.rel target = $region3
    $region8: #{tpu_custom_call.1} parent=1 // loop_exit
      _
    %1198 = vsyncpa [#allocation3], 1
    %s1199 = scalar_lea.sflag [#allocation3], 1
    %1200 = vsyncpa %s1199, 1

</llo_original>
